<compile_context>
chip_gen: v7x
topology: tpu7x:2x2x1
jax: 0.10.0
libtpu: 0.0.40
codegen_flags: <defaults>
</compile_context>

<pallas_src>
import jax
import jax.numpy as jnp
from jax.experimental import pallas as pl
from jax.experimental.pallas import tpu as pltpu


_SQRT_2_OVER_PI = 0.7978845608028654  # sqrt(2 / pi)
_MiB = 1024 * 1024


def _gelu_kernel(x_ref, o_ref):
    x = x_ref[...].astype(jnp.float32)
    inner = _SQRT_2_OVER_PI * (x + 0.044715 * (x * x * x))
    y = 0.5 * x * (1.0 + jnp.tanh(inner))
    o_ref[...] = y.astype(o_ref.dtype)


def _round_down_to_8(n: int) -> int:
    return (n // 8) * 8


def _round_up_to_8(n: int) -> int:
    return ((n + 7) // 8) * 8


def _vmem_capacity_bytes() -> int:
    """Trace-time VMEM capacity query with a conservative (v7x-sized) fallback."""
    try:
        info = pltpu.get_tpu_info()
        cap = getattr(info, "vmem_capacity_bytes", None)
        if cap:
            return int(cap)
    except Exception:
        pass
    return 64 * _MiB  # assume the smallest (v7x per-TC) VMEM if the query fails


def _pick_tile_rows(rows: int, d: int, itemsize: int, vmem_capacity: int) -> int:
    """Row-tile height: byte-budgeted, multiple of 8 (or full extent), and
    small enough to leave >=2 (ideally >=4) grid steps for megacore sharding."""
    if rows <= 8:
        # Full extent along the row axis is always a legal block height,
        # even when rows is not a multiple of 8 (e.g. the 6-row demo input).
        return rows

    # Per-buffer byte target: bigger tiles on small-VMEM / high-BW chips (v7x)
    # to amortize per-step overhead; ~4 MiB is already ~85% of roofline on
    # v5e/v6e. Always keep 2 buffers x (in_tile + out_tile) <= half of VMEM.
    if vmem_capacity <= 64 * _MiB:
        target_tile_bytes = 8 * _MiB
    else:
        target_tile_bytes = 4 * _MiB
    target_tile_bytes = min(target_tile_bytes, (vmem_capacity // 2) // 4)

    row_bytes = d * itemsize
    # TODO(synk): for pathologically wide D (row_bytes >> target), also tile D.
    tr_budget = max(8, _round_down_to_8(target_tile_bytes // max(row_bytes, 1)))

    # Guarantee several grid steps so v7x's second TensorCore gets work.
    if rows >= 32:
        min_steps = 4
    elif rows >= 16:
        min_steps = 2
    else:
        min_steps = 1
    tr_steps = max(8, _round_up_to_8(pl.cdiv(rows, min_steps)))

    tr = min(tr_budget, tr_steps)
    if tr >= rows:
        return rows  # single full-extent block (legal even if rows % 8 != 0)
    return tr


def gelu(x: jax.Array) -> jax.Array:
    """Tanh-approx GELU, elementwise, matching the PyTorch reference."""
    orig_shape = x.shape
    d = orig_shape[-1]
    # D=768 is a multiple of 128, so the last dim stays lane-dense as-is.
    # TODO(synk): if D were ever not a multiple of 128, flatten to 1D and
    # re-tile as (N/1024, 1024) to keep output stores unmasked.
    x2 = x.reshape(-1, d)          # (rows, D) — lane-dense last dim
    rows = x2.shape[0]

    itemsize = jnp.dtype(x.dtype).itemsize
    vmem_capacity = _vmem_capacity_bytes()
    tr = _pick_tile_rows(rows, d, itemsize, vmem_capacity)
    grid = (pl.cdiv(rows, tr),)

    # Double-buffered input + output tile footprint, plus headroom; never ask
    # for more than ~3/4 of physical VMEM.
    footprint = 4 * tr * d * itemsize
    vmem_limit = int(min(vmem_capacity * 3 // 4, max(2 * footprint, 16 * _MiB)))

    out = pl.pallas_call(
        _gelu_kernel,
        out_shape=jax.ShapeDtypeStruct((rows, d), x.dtype),
        grid=grid,
        in_specs=[pl.BlockSpec((tr, d), lambda i: (i, 0))],
        out_specs=pl.BlockSpec((tr, d), lambda i: (i, 0)),
        compiler_params=pltpu.CompilerParams(
            dimension_semantics=("parallel",),
            vmem_limit_bytes=vmem_limit,
        ),
        # Note: callers that can donate `x` could add input_output_aliases={0: 0}
        # to drop the extra HBM output allocation; not done by default to keep
        # the functional (non-donating) semantics.
    )(x2)
    return out.reshape(orig_shape)


def gelu_ref(x: jax.Array) -> jax.Array:
    # Pure-JAX reference, identical formula to the PyTorch module.
    return 0.5 * x * (
        1.0 + jnp.tanh(jnp.sqrt(2.0 / jnp.pi) * (x + 0.044715 * x ** 3))
    )


if __name__ == "__main__":
    key = jax.random.PRNGKey(0)

    # 1) Matches the module's example input: torch.rand(2, 3, 768).
    x_small = jax.random.uniform(key, (2, 3, 768), dtype=jnp.float32)
    y_small = jax.block_until_ready(gelu(x_small))
    assert y_small.shape == x_small.shape and y_small.dtype == x_small.dtype
    assert jnp.allclose(y_small, gelu_ref(x_small), atol=1e-5, rtol=1e-5)

    # 2) Larger input to exercise the multi-step (pipelined, megacore-shardable)
    #    row-tiled grid: rows=2048 -> >=4 grid steps.
    key2 = jax.random.PRNGKey(1)
    x_big = jax.random.normal(key2, (8, 256, 768), dtype=jnp.float32)
    y_big = jax.block_until_ready(gelu(x_big))
    assert y_big.shape == x_big.shape and y_big.dtype == x_big.dtype
    assert jnp.allclose(y_big, gelu_ref(x_big), atol=1e-5, rtol=1e-5)

    # 3) Medium input that previously collapsed to a single grid step: rows=512
    #    now splits into >=4 tiles so both v7x TensorCores get work.
    key3 = jax.random.PRNGKey(2)
    x_med = jax.random.normal(key3, (2, 256, 768), dtype=jnp.float32)
    y_med = jax.block_until_ready(gelu(x_med))
    assert jnp.allclose(y_med, gelu_ref(x_med), atol=1e-5, rtol=1e-5)

    print("KERNEL_OK")
</pallas_src>

<mosaic_0001>
module attributes {stable_mosaic.version = 11 : i64} {
  func.func @_gelu_kernel(%arg0: i32, %arg1: memref<6x768xf32, #tpu.memory_space<vmem>>, %arg2: memref<6x768xf32, #tpu.memory_space<vmem>>) attributes {dimension_semantics = [#tpu.dimension_semantics<parallel>], iteration_bounds = array<i64: 1>, scalar_prefetch = 0 : i64, scratch_operands = 0 : i64, tpu.core_type = #tpu.core_type<tc>, window_params = [{transform_indices = @transform_0, window_bounds = array<i64: 6, 768>}, {transform_indices = @transform_1, window_bounds = array<i64: 6, 768>}]} {
    %c0 = arith.constant 0 : index
    %c0_0 = arith.constant 0 : index
    %0 = vector.load %arg1[%c0, %c0_0] : memref<6x768xf32, #tpu.memory_space<vmem>>, vector<6x768xf32>
    %1 = arith.mulf %0, %0 : vector<6x768xf32>
    %2 = arith.mulf %1, %0 : vector<6x768xf32>
    %cst = arith.constant 4.471500e-02 : f32
    %3 = vector.broadcast %cst : f32 to vector<6x768xf32>
    %4 = arith.mulf %3, %2 : vector<6x768xf32>
    %5 = arith.addf %0, %4 : vector<6x768xf32>
    %cst_1 = arith.constant 0.797884583 : f32
    %6 = vector.broadcast %cst_1 : f32 to vector<6x768xf32>
    %7 = arith.mulf %6, %5 : vector<6x768xf32>
    %cst_2 = arith.constant 5.000000e-01 : f32
    %8 = vector.broadcast %cst_2 : f32 to vector<6x768xf32>
    %9 = arith.mulf %8, %0 : vector<6x768xf32>
    %10 = math.tanh %7 : vector<6x768xf32>
    %cst_3 = arith.constant 1.000000e+00 : f32
    %11 = vector.broadcast %cst_3 : f32 to vector<6x768xf32>
    %12 = arith.addf %11, %10 : vector<6x768xf32>
    %13 = arith.mulf %9, %12 : vector<6x768xf32>
    %c0_4 = arith.constant 0 : index
    %c0_5 = arith.constant 0 : index
    %14 = vector.load %arg2[%c0_4, %c0_5] : memref<6x768xf32, #tpu.memory_space<vmem>>, vector<6x768xf32>
    tpu.vector_store %arg2[%c0_4, %c0_5], %13 {strides = array<i32>} : memref<6x768xf32, #tpu.memory_space<vmem>>, vector<6x768xf32>,
    return
  }
  func.func @transform_0(%arg0: i32) -> (i32, i32) {
    %c0_i32 = arith.constant 0 : i32
    %c0_i32_0 = arith.constant 0 : i32
    return %arg0, %c0_i32 : i32, i32
  }
  func.func @transform_1(%arg0: i32) -> (i32, i32) {
    %c0_i32 = arith.constant 0 : i32
    %c0_i32_0 = arith.constant 0 : i32
    return %arg0, %c0_i32 : i32, i32
  }
}

</mosaic_0001>

<llo_original>
// kernel: tpu_custom_call.1
$region0: #{tpu_custom_call.1}
  #allocation0 [shape = 'u32[]', space=smem, size = 0x4, offset = 0x4, fixed_abs, tag = 'smem constant byte address 0x4 - core index']
  #allocation1 [shape = 'u32[144,128]{1,0:T(1,128)}', space=vmem, size = 0x12000, scoped, tag = 'internal scratch']
  %s0 = inlined_call_operand.hbm [shape: f32[6,768], index: 0, kind: input, shape index: {}]
  %s1 = inlined_call_operand.hbm [shape: f32[6,768], index: 1, kind: output, shape index: {}]
  %s2 = sld [smem:[#allocation0]]
  $region18: #{tpu_custom_call.1} parent=0
    _
  %s4 = ssub.s32 1, %s2
  %s5 = scalar_select 0, %s4, %s2
  $region1: #{tpu_custom_call.1} parent=0
    #allocation2 [shape = 'u8[24576]{0}', space=vmem, size = 0x6000, scoped, tag = 'input window, operand 0, single buffered']
    #allocation3 [shape = 's32[1]{0}', space=sflag, size = 0x4, scoped, tag = 'scoped memory for tpu_custom_call.1']
    #allocation4 [shape = 's32[1]{0}', space=sflag, size = 0x4, scoped, tag = 'scoped memory for tpu_custom_call.1']
    #allocation5 [shape = 'u8[24576]{0}', space=vmem, size = 0x6000, scoped, tag = 'output window, operand 0, single buffered']
    %6 = vsyncpa [#allocation3], 0
    %7 = vsyncpa [#allocation4], 0
    // Predicated region
    $region2: #{tpu_custom_call.1} parent=1 // pred_check
      _
    $region3: #{tpu_custom_call.1} parent=1 // pred_check_branch
      %9 = sbr.rel (0) target = $region5
    $region4: #{tpu_custom_call.1} parent=1 // pred_region
      %s11 = ssub.s32 768, 768
      %12 = vsyncadd [#allocation3], %s11
      %s14 = sshll.u32 [#allocation2], 4
      %s15 = int_to_ptr.vmem [resolvable:$true] %s14
      %17 = dma.hbm_to_vmem [thread:$0]  %s0, 768, %s15, [#allocation3]
    $region5: #{tpu_custom_call.1} parent=1 // pred_fallthru
      _
    // Predicated region
    $region6: #{tpu_custom_call.1} parent=1 // pred_check
      _
    $region7: #{tpu_custom_call.1} parent=1 // pred_check_branch
      %19 = sbr.rel (0) target = $region9
    $region8: #{tpu_custom_call.1} parent=1 // pred_region
      %20 = dma.done [#allocation3], 768
    $region9: #{tpu_custom_call.1} parent=1 // pred_fallthru
      _
    %v21 = vld [vmem:[#allocation2] sm:$0x3f]
    %v22 = vld [vmem:[#allocation2 + $0x8] sm:$0x3f]
    %v23 = vld [vmem:[#allocation2 + $0x10] sm:$0x3f]
    %v24 = vld [vmem:[#allocation2 + $0x18] sm:$0x3f]
    %v25 = vld [vmem:[#allocation2 + $0x20] sm:$0x3f]
    %v26 = vld [vmem:[#allocation2 + $0x28] sm:$0x3f]
    %v27 = vmul.f32 %v21, %v21
    %v28 = vmul.f32 %v22, %v22
    %v29 = vmul.f32 %v23, %v23
    %v30 = vmul.f32 %v24, %v24
    %v31 = vmul.f32 %v25, %v25
    %v32 = vmul.f32 %v26, %v26
    %v33 = vmul.f32 %v27, %v21
    %v34 = vmul.f32 %v28, %v22
    %v35 = vmul.f32 %v29, %v23
    %v36 = vmul.f32 %v30, %v24
    %v37 = vmul.f32 %v31, %v25
    %v38 = vmul.f32 %v32, %v26
    %v39 = vmul.f32 %v33, 0.044715
    %v40 = vmul.f32 %v34, 0.044715
    %v41 = vmul.f32 %v35, 0.044715
    %v42 = vmul.f32 %v36, 0.044715
    %v43 = vmul.f32 %v37, 0.044715
    %v44 = vmul.f32 %v38, 0.044715
    %v45 = vadd.f32 %v21, %v39
    %v46 = vadd.f32 %v22, %v40
    %v47 = vadd.f32 %v23, %v41
    %v48 = vadd.f32 %v24, %v42
    %v49 = vadd.f32 %v25, %v43
    %v50 = vadd.f32 %v26, %v44
    %v51 = vmul.f32 %v45, 0.7978846
    %v52 = vmul.f32 %v46, 0.7978846
    %v53 = vmul.f32 %v47, 0.7978846
    %v54 = vmul.f32 %v48, 0.7978846
    %v55 = vmul.f32 %v49, 0.7978846
    %v56 = vmul.f32 %v50, 0.7978846
    %v57 = vmul.f32 %v21, 0.5
    %v58 = vmul.f32 %v22, 0.5
    %v59 = vmul.f32 %v23, 0.5
    %v60 = vmul.f32 %v24, 0.5
    %v61 = vmul.f32 %v25, 0.5
    %v62 = vmul.f32 %v26, 0.5
    %v63 = vtanh.pop %v51
    %v64 = vtanh.pop %v52
    %v65 = vtanh.pop %v53
    %v66 = vtanh.pop %v54
    %v67 = vtanh.pop %v55
    %v68 = vtanh.pop %v56
    %v69 = vadd.f32 %v63, 1.0
    %v70 = vadd.f32 %v64, 1.0
    %v71 = vadd.f32 %v65, 1.0
    %v72 = vadd.f32 %v66, 1.0
    %v73 = vadd.f32 %v67, 1.0
    %v74 = vadd.f32 %v68, 1.0
    %v75 = vmul.f32 %v57, %v69
    %v76 = vmul.f32 %v58, %v70
    %v77 = vmul.f32 %v59, %v71
    %v78 = vmul.f32 %v60, %v72
    %v79 = vmul.f32 %v61, %v73
    %v80 = vmul.f32 %v62, %v74
    %81 = vst [vmem:[#allocation5] sm:$0x3f] %v75
    %82 = vst [vmem:[#allocation5 + $0x8] sm:$0x3f] %v76
    %83 = vst [vmem:[#allocation5 + $0x10] sm:$0x3f] %v77
    %84 = vst [vmem:[#allocation5 + $0x18] sm:$0x3f] %v78
    %85 = vst [vmem:[#allocation5 + $0x20] sm:$0x3f] %v79
    %86 = vst [vmem:[#allocation5 + $0x28] sm:$0x3f] %v80
    // Predicated region
    $region10: #{tpu_custom_call.1} parent=1 // pred_check
      _
    $region11: #{tpu_custom_call.1} parent=1 // pred_check_branch
      %88 = sbr.rel (0) target = $region13
    $region12: #{tpu_custom_call.1} parent=1 // pred_region
      %s90 = ssub.s32 768, 768
      %91 = vsyncadd [#allocation4], %s90
      %s93 = sshll.u32 [#allocation5], 4
      %s94 = int_to_ptr.vmem [resolvable:$true] %s93
      %96 = dma.vmem_to_hbm [thread:$0]  %s94, 768, %s1, [#allocation4]
    $region13: #{tpu_custom_call.1} parent=1 // pred_fallthru
      _
    // Predicated region
    $region14: #{tpu_custom_call.1} parent=1 // pred_check
      _
    $region15: #{tpu_custom_call.1} parent=1 // pred_check_branch
      %98 = sbr.rel (0) target = $region17
    $region16: #{tpu_custom_call.1} parent=1 // pred_region
      %99 = dma.done [#allocation4], 768
    $region17: #{tpu_custom_call.1} parent=1 // pred_fallthru
      _
    %100 = vsyncpa [#allocation3], 1
    %101 = vsyncpa [#allocation4], 1

</llo_original>
